<compile_context>
chip_gen: v5e
topology: v5e:2x2
jax: 0.10.0
libtpu: 0.0.40
codegen_flags: <defaults>
</compile_context>

<pallas_src>
import functools
import math

import jax
import jax.numpy as jnp
from jax.experimental import pallas as pl
from jax.experimental.pallas import tpu as pltpu


# ----------------------------- fused Pallas kernel -----------------------------

def _projection_head_kernel(x_ref, wp_ref, bp_ref, wf_ref, bf_ref, g_ref, b_ref, o_ref,
                            *, eps, mxu_dtype):
    # projection: x @ W_proj + b_proj   (MXU, f32 accumulate)
    x = x_ref[...].astype(mxu_dtype)
    wp = wp_ref[...].astype(mxu_dtype)
    proj = jnp.dot(x, wp, preferred_element_type=jnp.float32)
    proj = proj + bp_ref[...].astype(jnp.float32)

    # exact erf-GELU (torch.nn.GELU default), elementwise math kept in f32
    inv_sqrt2 = jnp.float32(1.0 / math.sqrt(2.0))
    h = 0.5 * proj * (1.0 + jax.lax.erf(proj * inv_sqrt2))

    # fc: h @ W_fc + b_fc
    y = jnp.dot(h.astype(mxu_dtype), wf_ref[...].astype(mxu_dtype),
                preferred_element_type=jnp.float32)
    y = y + bf_ref[...].astype(jnp.float32)

    # TODO(synk): nn.Dropout(p) is identity at inference; train-mode stochastic masking omitted.
    z = y + proj

    # LayerNorm over the last dim (biased variance, eps=1e-5), all in f32
    mu = jnp.mean(z, axis=-1, keepdims=True)
    zc = z - mu
    var = jnp.mean(zc * zc, axis=-1, keepdims=True)
    inv = jax.lax.rsqrt(var + jnp.float32(eps))
    out = zc * inv * g_ref[...].astype(jnp.float32) + b_ref[...].astype(jnp.float32)

    o_ref[...] = out.astype(o_ref.dtype)


def _pick_row_tile(M):
    """Sublane-aligned row tile; >=2 grid steps when possible so v7x's 2nd TC is used."""
    if M <= 8:
        return 8
    half = -(-M // 2)
    tm = -(-half // 8) * 8
    return min(128, tm)


def projection_head(x, params, *, eps=1e-5, mxu_dtype=jnp.float32):
    """x: [..., embedding_dim] -> [..., projection_dim]; whole forward in one pallas_call."""
    lead_shape = x.shape[:-1]
    E = x.shape[-1]
    P = params["w_proj"].shape[1]

    x2d = x.reshape(-1, E)
    M = x2d.shape[0]
    tm = _pick_row_tile(M)
    Mp = ((M + tm - 1) // tm) * tm
    if Mp != M:                                   # remainder rows -> pad, slice after
        x2d = jnp.pad(x2d, ((0, Mp - M), (0, 0)))

    b_proj = params["b_proj"].reshape(1, P)
    b_fc = params["b_fc"].reshape(1, P)
    ln_g = params["ln_g"].reshape(1, P)
    ln_b = params["ln_b"].reshape(1, P)

    # advisory cost hint for XLA's scheduler around a very small custom call
    flops = 2 * Mp * E * P + 2 * Mp * P * P + 12 * Mp * P
    transcendentals = Mp * P
    bytes_accessed = 4 * (Mp * E + E * P + P * P + 4 * P + Mp * P)

    out = pl.pallas_call(
        functools.partial(_projection_head_kernel, eps=eps, mxu_dtype=mxu_dtype),
        out_shape=jax.ShapeDtypeStruct((Mp, P), x.dtype),
        grid_spec=pltpu.PrefetchScalarGridSpec(
            num_scalar_prefetch=0,
            grid=(Mp // tm,),
            in_specs=[
                pl.BlockSpec((tm, E), lambda i: (i, 0)),   # x row tile
                pl.BlockSpec((E, P), lambda i: (0, 0)),    # W_proj
                pl.BlockSpec((1, P), lambda i: (0, 0)),    # b_proj
                pl.BlockSpec((P, P), lambda i: (0, 0)),    # W_fc
                pl.BlockSpec((1, P), lambda i: (0, 0)),    # b_fc
                pl.BlockSpec((1, P), lambda i: (0, 0)),    # ln gamma
                pl.BlockSpec((1, P), lambda i: (0, 0)),    # ln beta
            ],
            out_specs=pl.BlockSpec((tm, P), lambda i: (i, 0)),
        ),
        compiler_params=pltpu.CompilerParams(
            dimension_semantics=("parallel",),
        ),
        cost_estimate=pl.CostEstimate(
            flops=flops, transcendentals=transcendentals, bytes_accessed=bytes_accessed),
    )(x2d, params["w_proj"], b_proj, params["w_fc"], b_fc, ln_g, ln_b)

    return out[:M].reshape(lead_shape + (P,))


# ----------------------------- pure-JAX reference -----------------------------

def projection_head_reference(x, params, eps=1e-5):
    proj = x @ params["w_proj"] + params["b_proj"].reshape(1, -1)
    h = jax.nn.gelu(proj, approximate=False)
    y = h @ params["w_fc"] + params["b_fc"].reshape(1, -1)
    z = y + proj
    mu = z.mean(-1, keepdims=True)
    var = ((z - mu) ** 2).mean(-1, keepdims=True)
    return (z - mu) * jax.lax.rsqrt(var + eps) * params["ln_g"].reshape(1, -1) \
        + params["ln_b"].reshape(1, -1)


# ----------------------------- main -----------------------------

if __name__ == "__main__":
    B, E, P = 16, 256, 128            # batch, embedding_dim, projection_dim (small, lane-aligned)
    key = jax.random.PRNGKey(0)
    ks = jax.random.split(key, 7)

    x = jax.random.normal(ks[0], (B, E), jnp.float32)
    params = dict(
        w_proj=0.02 * jax.random.normal(ks[1], (E, P), jnp.float32),
        b_proj=0.02 * jax.random.normal(ks[2], (1, P), jnp.float32),
        w_fc=0.02 * jax.random.normal(ks[3], (P, P), jnp.float32),
        b_fc=0.02 * jax.random.normal(ks[4], (1, P), jnp.float32),
        ln_g=jnp.ones((1, P), jnp.float32) + 0.01 * jax.random.normal(ks[5], (1, P), jnp.float32),
        ln_b=0.01 * jax.random.normal(ks[6], (1, P), jnp.float32),
    )

    out = jax.block_until_ready(projection_head(x, params))
    assert out.shape == (B, P)
    assert jnp.all(jnp.isfinite(out))

    ref = projection_head_reference(x, params)
    max_err = float(jnp.max(jnp.abs(out - ref)))
    assert max_err < 1e-2, f"mismatch vs reference: {max_err}"

    print("KERNEL_OK")
</pallas_src>

<mosaic_0001>
module attributes {stable_mosaic.version = 11 : i64} {
  func.func @_projection_head_kernel(%arg0: i32, %arg1: memref<8x256xf32, #tpu.memory_space<vmem>>, %arg2: memref<256x128xf32, #tpu.memory_space<vmem>>, %arg3: memref<1x128xf32, #tpu.memory_space<vmem>>, %arg4: memref<128x128xf32, #tpu.memory_space<vmem>>, %arg5: memref<1x128xf32, #tpu.memory_space<vmem>>, %arg6: memref<1x128xf32, #tpu.memory_space<vmem>>, %arg7: memref<1x128xf32, #tpu.memory_space<vmem>>, %arg8: memref<8x128xf32, #tpu.memory_space<vmem>>) attributes {dimension_semantics = [#tpu.dimension_semantics<parallel>], iteration_bounds = array<i64: 2>, scalar_prefetch = 0 : i64, scratch_operands = 0 : i64, tpu.core_type = #tpu.core_type<tc>, window_params = [{transform_indices = @transform_0, window_bounds = array<i64: 8, 256>}, {pipeline_mode = #tpu.pipeline_mode<synchronous>, transform_indices = @transform_1, window_bounds = array<i64: 256, 128>}, {pipeline_mode = #tpu.pipeline_mode<synchronous>, transform_indices = @transform_2, window_bounds = array<i64: 1, 128>}, {pipeline_mode = #tpu.pipeline_mode<synchronous>, transform_indices = @transform_3, window_bounds = array<i64: 128, 128>}, {pipeline_mode = #tpu.pipeline_mode<synchronous>, transform_indices = @transform_4, window_bounds = array<i64: 1, 128>}, {pipeline_mode = #tpu.pipeline_mode<synchronous>, transform_indices = @transform_5, window_bounds = array<i64: 1, 128>}, {pipeline_mode = #tpu.pipeline_mode<synchronous>, transform_indices = @transform_6, window_bounds = array<i64: 1, 128>}, {transform_indices = @transform_7, window_bounds = array<i64: 8, 128>}]} {
    %c0 = arith.constant 0 : index
    %c0_0 = arith.constant 0 : index
    %0 = vector.load %arg1[%c0, %c0_0] : memref<8x256xf32, #tpu.memory_space<vmem>>, vector<8x256xf32>
    %c0_1 = arith.constant 0 : index
    %c0_2 = arith.constant 0 : index
    %1 = vector.load %arg2[%c0_1, %c0_2] : memref<256x128xf32, #tpu.memory_space<vmem>>, vector<256x128xf32>
    %cst = arith.constant dense<0.000000e+00> : vector<8x128xf32>
    %2 = tpu.matmul %0, %1, %cst {dimension_numbers = #tpu.dot_dimension_numbers<[1], [0], [0], [1], [0, 0, 1, 1], [], []>} : vector<8x256xf32>, vector<256x128xf32>, vector<8x128xf32> -> vector<8x128xf32>
    %c0_3 = arith.constant 0 : index
    %c0_4 = arith.constant 0 : index
    %3 = vector.load %arg3[%c0_3, %c0_4] : memref<1x128xf32, #tpu.memory_space<vmem>>, vector<1x128xf32>
    %4 = vector.broadcast %3 : vector<1x128xf32> to vector<8x128xf32>
    %5 = arith.addf %2, %4 : vector<8x128xf32>
    %cst_5 = arith.constant 5.000000e-01 : f32
    %6 = vector.broadcast %cst_5 : f32 to vector<8x128xf32>
    %7 = arith.mulf %6, %5 : vector<8x128xf32>
    %cst_6 = arith.constant 0.707106769 : f32
    %8 = vector.broadcast %cst_6 : f32 to vector<8x128xf32>
    %9 = arith.mulf %5, %8 : vector<8x128xf32>
    %10 = math.erf %9 : vector<8x128xf32>
    %cst_7 = arith.constant 1.000000e+00 : f32
    %11 = vector.broadcast %cst_7 : f32 to vector<8x128xf32>
    %12 = arith.addf %11, %10 : vector<8x128xf32>
    %13 = arith.mulf %7, %12 : vector<8x128xf32>
    %c0_8 = arith.constant 0 : index
    %c0_9 = arith.constant 0 : index
    %14 = vector.load %arg4[%c0_8, %c0_9] : memref<128x128xf32, #tpu.memory_space<vmem>>, vector<128x128xf32>
    %cst_10 = arith.constant dense<0.000000e+00> : vector<8x128xf32>
    %15 = tpu.matmul %13, %14, %cst_10 {dimension_numbers = #tpu.dot_dimension_numbers<[1], [0], [0], [1], [0, 0, 1, 1], [], []>} : vector<8x128xf32>, vector<128x128xf32>, vector<8x128xf32> -> vector<8x128xf32>
    %c0_11 = arith.constant 0 : index
    %c0_12 = arith.constant 0 : index
    %16 = vector.load %arg5[%c0_11, %c0_12] : memref<1x128xf32, #tpu.memory_space<vmem>>, vector<1x128xf32>
    %17 = vector.broadcast %16 : vector<1x128xf32> to vector<8x128xf32>
    %18 = arith.addf %15, %17 : vector<8x128xf32>
    %19 = arith.addf %18, %5 : vector<8x128xf32>
    %cst_13 = arith.constant dense<0.000000e+00> : vector<8xf32>
    %20 = vector.multi_reduction <add>, %19, %cst_13 [1] : vector<8x128xf32> to vector<8xf32>
    %21 = vector.shape_cast %20 : vector<8xf32> to vector<8x1xf32>
    %cst_14 = arith.constant 1.280000e+02 : f32
    %22 = vector.broadcast %cst_14 : f32 to vector<8x1xf32>
    %23 = arith.divf %21, %22 : vector<8x1xf32>
    %24 = vector.broadcast %23 : vector<8x1xf32> to vector<8x128xf32>
    %25 = arith.subf %19, %24 : vector<8x128xf32>
    %26 = arith.mulf %25, %25 : vector<8x128xf32>
    %cst_15 = arith.constant dense<0.000000e+00> : vector<8xf32>
    %27 = vector.multi_reduction <add>, %26, %cst_15 [1] : vector<8x128xf32> to vector<8xf32>
    %28 = vector.shape_cast %27 : vector<8xf32> to vector<8x1xf32>
    %cst_16 = arith.constant 1.280000e+02 : f32
    %29 = vector.broadcast %cst_16 : f32 to vector<8x1xf32>
    %30 = arith.divf %28, %29 : vector<8x1xf32>
    %cst_17 = arith.constant 9.99999974E-6 : f32
    %31 = vector.broadcast %cst_17 : f32 to vector<8x1xf32>
    %32 = arith.addf %30, %31 : vector<8x1xf32>
    %33 = math.rsqrt %32 : vector<8x1xf32>
    %34 = vector.broadcast %33 : vector<8x1xf32> to vector<8x128xf32>
    %35 = arith.mulf %25, %34 : vector<8x128xf32>
    %c0_18 = arith.constant 0 : index
    %c0_19 = arith.constant 0 : index
    %36 = vector.load %arg6[%c0_18, %c0_19] : memref<1x128xf32, #tpu.memory_space<vmem>>, vector<1x128xf32>
    %37 = vector.broadcast %36 : vector<1x128xf32> to vector<8x128xf32>
    %38 = arith.mulf %35, %37 : vector<8x128xf32>
    %c0_20 = arith.constant 0 : index
    %c0_21 = arith.constant 0 : index
    %39 = vector.load %arg7[%c0_20, %c0_21] : memref<1x128xf32, #tpu.memory_space<vmem>>, vector<1x128xf32>
    %40 = vector.broadcast %39 : vector<1x128xf32> to vector<8x128xf32>
    %41 = arith.addf %38, %40 : vector<8x128xf32>
    %c0_22 = arith.constant 0 : index
    %c0_23 = arith.constant 0 : index
    %42 = vector.load %arg8[%c0_22, %c0_23] : memref<8x128xf32, #tpu.memory_space<vmem>>, vector<8x128xf32>
    tpu.vector_store %arg8[%c0_22, %c0_23], %41 {strides = array<i32>} : memref<8x128xf32, #tpu.memory_space<vmem>>, vector<8x128xf32>,
    return
  }
  func.func @transform_0(%arg0: i32) -> (i32, i32) {
    %c0_i32 = arith.constant 0 : i32
    %c0_i32_0 = arith.constant 0 : i32
    return %arg0, %c0_i32 : i32, i32
  }
  func.func @transform_1(%arg0: i32) -> (i32, i32) {
    %c0_i32 = arith.constant 0 : i32
    %c0_i32_0 = arith.constant 0 : i32
    %c0_i32_1 = arith.constant 0 : i32
    return %c0_i32, %c0_i32_0 : i32, i32
  }
  func.func @transform_2(%arg0: i32) -> (i32, i32) {
    %c0_i32 = arith.constant 0 : i32
    %c0_i32_0 = arith.constant 0 : i32
    %c0_i32_1 = arith.constant 0 : i32
    return %c0_i32, %c0_i32_0 : i32, i32
  }
  func.func @transform_3(%arg0: i32) -> (i32, i32) {
    %c0_i32 = arith.constant 0 : i32
    %c0_i32_0 = arith.constant 0 : i32
    %c0_i32_1 = arith.constant 0 : i32
    return %c0_i32, %c0_i32_0 : i32, i32
  }
  func.func @transform_4(%arg0: i32) -> (i32, i32) {
    %c0_i32 = arith.constant 0 : i32
    %c0_i32_0 = arith.constant 0 : i32
    %c0_i32_1 = arith.constant 0 : i32
    return %c0_i32, %c0_i32_0 : i32, i32
  }
  func.func @transform_5(%arg0: i32) -> (i32, i32) {
    %c0_i32 = arith.constant 0 : i32
    %c0_i32_0 = arith.constant 0 : i32
    %c0_i32_1 = arith.constant 0 : i32
    return %c0_i32, %c0_i32_0 : i32, i32
  }
  func.func @transform_6(%arg0: i32) -> (i32, i32) {
    %c0_i32 = arith.constant 0 : i32
    %c0_i32_0 = arith.constant 0 : i32
    %c0_i32_1 = arith.constant 0 : i32
    return %c0_i32, %c0_i32_0 : i32, i32
  }
  func.func @transform_7(%arg0: i32) -> (i32, i32) {
    %c0_i32 = arith.constant 0 : i32
    %c0_i32_0 = arith.constant 0 : i32
    return %arg0, %c0_i32 : i32, i32
  }
}

</mosaic_0001>

<llo_original>
// kernel: tpu_custom_call.1
$region0: #{tpu_custom_call.1}
  #allocation0 [shape = 'u32[]', space=smem, size = 0x4, offset = 0x4, fixed_abs, tag = 'smem constant byte address 0x4 - core index']
  #allocation1 [shape = 'u32[72,128]{1,0:T(1,128)}', space=vmem, size = 0x9000, scoped, tag = 'internal scratch']
  %s0 = inlined_call_operand.hbm [shape: f32[16,256], index: 0, kind: input, shape index: {}]
  %s1 = inlined_call_operand.hbm [shape: f32[256,128], index: 1, kind: input, shape index: {}]
  %s2 = inlined_call_operand.vmem [shape: f32[1,128], index: 2, kind: input, shape index: {}]
  %s3 = inlined_call_operand.hbm [shape: f32[128,128], index: 3, kind: input, shape index: {}]
  %s4 = inlined_call_operand.vmem [shape: f32[1,128], index: 4, kind: input, shape index: {}]
  %s5 = inlined_call_operand.vmem [shape: f32[1,128], index: 5, kind: input, shape index: {}]
  %s6 = inlined_call_operand.vmem [shape: f32[1,128], index: 6, kind: input, shape index: {}]
  %s7 = inlined_call_operand.hbm [shape: f32[16,128], index: 7, kind: output, shape index: {}]
  %s8 = sld [smem:[#allocation0]]
  $region73: #{tpu_custom_call.1} parent=0
    _
  %s10 = ssub.s32 1, %s8
  %s11 = scalar_select 0, %s10, %s8
  $region1: #{tpu_custom_call.1} parent=0
    #allocation2 [shape = 'u8[16384]{0}', space=vmem, size = 0x4000, scoped, tag = 'input window, operand 0']
    #allocation3 [shape = 's32[2]{0}', space=sflag, size = 0x8, scoped, tag = 'scoped memory for tpu_custom_call.1']
    #allocation4 [shape = 's32[2]{0}', space=sflag, size = 0x8, scoped, tag = 'scoped memory for tpu_custom_call.1']
    #allocation5 [shape = 'u8[131072]{0}', space=vmem, size = 0x20000, scoped, tag = 'input window, operand 1, single buffered']
    #allocation6 [shape = 's32[1]{0}', space=sflag, size = 0x4, scoped, tag = 'scoped memory for tpu_custom_call.1']
    #allocation7 [shape = 'u8[65536]{0}', space=vmem, size = 0x10000, scoped, tag = 'input window, operand 3, single buffered']
    #allocation8 [shape = 'u8[8192]{0}', space=vmem, size = 0x2000, scoped, tag = 'output window, operand 0']
    %12 = vsyncpa [#allocation3], 0
    %s13 = scalar_lea.sflag [#allocation3], 1
    %14 = vsyncpa %s13, 0
    %15 = vsyncpa [#allocation6], 0
    %16 = vsyncpa [#allocation4], 0
    %s17 = scalar_lea.sflag [#allocation4], 1
    %18 = vsyncpa %s17, 0
    loop: start=0, step=1, limit=4
    $region2: #{tpu_custom_call.1} parent=1 // loop_pre_header
      _
    $region3: #{tpu_custom_call.1} parent=1 // loop_header
      %s20 = sphi 0, %s24
      %p21 = scmp.ge.s32.totalorder %s20, 4
      %s30 = sphi 0, %s32
      %s33 = sphi 0, %s30
      %s34 = sphi 0, %s33
      %s50 = sphi 0, %s34
      %s54 = sphi 0, %s54
      %s56 = sphi 0, %s54
      %s57 = sphi 0, %s56
      %s71 = sphi 0, %s57
      %s75 = sphi 0, %s75
      %s77 = sphi 0, %s75
      %s78 = sphi 0, %s77
      %s92 = sphi 0, %s78
      %s96 = sphi 0, %s96
      %s98 = sphi 0, %s96
      %s99 = sphi 0, %s98
      %s113 = sphi 0, %s99
      %s117 = sphi 0, %s117
      %s119 = sphi 0, %s117
      %s120 = sphi 0, %s119
      %s134 = sphi 0, %s120
      %s138 = sphi 0, %s138
      %s140 = sphi 0, %s138
      %s141 = sphi 0, %s140
      %s155 = sphi 0, %s141
      %s159 = sphi 0, %s159
      %s161 = sphi 0, %s159
      %s162 = sphi 0, %s161
      %s176 = sphi 0, %s162
      %s182 = sphi 0, %s184
      %s185 = sphi 0, %s182
      %s186 = sphi 0, %s185
      %s202 = sphi 0, %s186
    $region4: #{tpu_custom_call.1} parent=1 // loop_header_branch
      %23 = sbr.rel (%p21) target = $region8
    $region5: #{tpu_custom_call.1} parent=1 // loop_body
      %s25 = ssub.s32 %s20, 1
      %s26 = ssub.s32 %s20, 2
      %s27 = sadd.s32 %s20, 1
      %s28 = ssub.s32 %s20, %s27
      %p29 = scmp.eq.s32.totalorder %s28, 0
      %s31 = sadd.s32 %s30, 1
      %s32 = scalar_select %p29, %s30, %s31
      %p35 = pneg %p29
      %p36 = scmp.eq.s32.totalorder %s20, 1
      %p37 = por %p35, %p36
      %p38 = scmp.ne.s32.totalorder %s30, %s33
      %p39 = scmp.eq.s32.totalorder %s20, 0
      %p40 = por %p38, %p39
      %p41 = scmp.ne.s32.totalorder %s30, %s33
      %p42 = scmp.eq.s32.totalorder %s25, 1
      %p43 = por %p41, %p42
      %p44 = scmp.ne.s32.totalorder %s33, %s34
      %p45 = scmp.eq.s32.totalorder %s25, 0
      %p46 = por %p44, %p45
      %p47 = scmp.ne.s32.totalorder %s33, %s34
      %p48 = scmp.eq.s32.totalorder %s26, 1
      %p49 = por %p47, %p48
      %p51 = scmp.ne.s32.totalorder %s34, %s50
      %p52 = scmp.eq.s32.totalorder %s26, 0
      %p53 = por %p51, %p52
      %s55 = sadd.s32 %s54, 1
      %p58 = scmp.eq.s32.totalorder %s20, 1
      %p59 = scmp.ne.s32.totalorder %s54, %s56
      %p60 = scmp.eq.s32.totalorder %s20, 0
      %p61 = por %p59, %p60
      %p62 = scmp.ne.s32.totalorder %s54, %s56
      %p63 = scmp.eq.s32.totalorder %s25, 1
      %p64 = por %p62, %p63
      %p65 = scmp.ne.s32.totalorder %s56, %s57
      %p66 = scmp.eq.s32.totalorder %s25, 0
      %p67 = por %p65, %p66
      %p68 = scmp.ne.s32.totalorder %s56, %s57
      %p69 = scmp.eq.s32.totalorder %s26, 1
      %p70 = por %p68, %p69
      %p72 = scmp.ne.s32.totalorder %s57, %s71
      %p73 = scmp.eq.s32.totalorder %s26, 0
      %p74 = por %p72, %p73
      %s76 = sadd.s32 %s75, 1
      %p79 = scmp.eq.s32.totalorder %s20, 1
      %p80 = scmp.ne.s32.totalorder %s75, %s77
      %p81 = scmp.eq.s32.totalorder %s20, 0
      %p82 = por %p80, %p81
      %p83 = scmp.ne.s32.totalorder %s75, %s77
      %p84 = scmp.eq.s32.totalorder %s25, 1
      %p85 = por %p83, %p84
      %p86 = scmp.ne.s32.totalorder %s77, %s78
      %p87 = scmp.eq.s32.totalorder %s25, 0
      %p88 = por %p86, %p87
      %p89 = scmp.ne.s32.totalorder %s77, %s78
      %p90 = scmp.eq.s32.totalorder %s26, 1
      %p91 = por %p89, %p90
      %p93 = scmp.ne.s32.totalorder %s78, %s92
      %p94 = scmp.eq.s32.totalorder %s26, 0
      %p95 = por %p93, %p94
      %s97 = sadd.s32 %s96, 1
      %p100 = scmp.eq.s32.totalorder %s20, 1
      %p101 = scmp.ne.s32.totalorder %s96, %s98
      %p102 = scmp.eq.s32.totalorder %s20, 0
      %p103 = por %p101, %p102
      %p104 = scmp.ne.s32.totalorder %s96, %s98
      %p105 = scmp.eq.s32.totalorder %s25, 1
      %p106 = por %p104, %p105
      %p107 = scmp.ne.s32.totalorder %s98, %s99
      %p108 = scmp.eq.s32.totalorder %s25, 0
      %p109 = por %p107, %p108
      %p110 = scmp.ne.s32.totalorder %s98, %s99
      %p111 = scmp.eq.s32.totalorder %s26, 1
      %p112 = por %p110, %p111
      %p114 = scmp.ne.s32.totalorder %s99, %s113
      %p115 = scmp.eq.s32.totalorder %s26, 0
      %p116 = por %p114, %p115
      %s118 = sadd.s32 %s117, 1
      %p121 = scmp.eq.s32.totalorder %s20, 1
      %p122 = scmp.ne.s32.totalorder %s117, %s119
      %p123 = scmp.eq.s32.totalorder %s20, 0
      %p124 = por %p122, %p123
      %p125 = scmp.ne.s32.totalorder %s117, %s119
      %p126 = scmp.eq.s32.totalorder %s25, 1
      %p127 = por %p125, %p126
      %p128 = scmp.ne.s32.totalorder %s119, %s120
      %p129 = scmp.eq.s32.totalorder %s25, 0
      %p130 = por %p128, %p129
      %p131 = scmp.ne.s32.totalorder %s119, %s120
      %p132 = scmp.eq.s32.totalorder %s26, 1
      %p133 = por %p131, %p132
      %p135 = scmp.ne.s32.totalorder %s120, %s134
      %p136 = scmp.eq.s32.totalorder %s26, 0
      %p137 = por %p135, %p136
      %s139 = sadd.s32 %s138, 1
      %p142 = scmp.eq.s32.totalorder %s20, 1
      %p143 = scmp.ne.s32.totalorder %s138, %s140
      %p144 = scmp.eq.s32.totalorder %s20, 0
      %p145 = por %p143, %p144
      %p146 = scmp.ne.s32.totalorder %s138, %s140
      %p147 = scmp.eq.s32.totalorder %s25, 1
      %p148 = por %p146, %p147
      %p149 = scmp.ne.s32.totalorder %s140, %s141
      %p150 = scmp.eq.s32.totalorder %s25, 0
      %p151 = por %p149, %p150
      %p152 = scmp.ne.s32.totalorder %s140, %s141
      %p153 = scmp.eq.s32.totalorder %s26, 1
      %p154 = por %p152, %p153
      %p156 = scmp.ne.s32.totalorder %s141, %s155
      %p157 = scmp.eq.s32.totalorder %s26, 0
      %p158 = por %p156, %p157
      %s160 = sadd.s32 %s159, 1
      %p163 = scmp.eq.s32.totalorder %s20, 1
      %p164 = scmp.ne.s32.totalorder %s159, %s161
      %p165 = scmp.eq.s32.totalorder %s20, 0
      %p166 = por %p164, %p165
      %p167 = scmp.ne.s32.totalorder %s159, %s161
      %p168 = scmp.eq.s32.totalorder %s25, 1
      %p169 = por %p167, %p168
      %p170 = scmp.ne.s32.totalorder %s161, %s162
      %p171 = scmp.eq.s32.totalorder %s25, 0
      %p172 = por %p170, %p171
      %p173 = scmp.ne.s32.totalorder %s161, %s162
      %p174 = scmp.eq.s32.totalorder %s26, 1
      %p175 = por %p173, %p174
      %p177 = scmp.ne.s32.totalorder %s162, %s176
      %p178 = scmp.eq.s32.totalorder %s26, 0
      %p179 = por %p177, %p178
      %s180 = ssub.s32 %s20, %s27
      %p181 = scmp.eq.s32.totalorder %s180, 0
      %s183 = sadd.s32 %s182, 1
      %s184 = scalar_select %p181, %s182, %s183
      %p187 = pneg %p181
      %p188 = scmp.eq.s32.totalorder %s20, 1
      %p189 = por %p187, %p188
      %p190 = scmp.ne.s32.totalorder %s182, %s185
      %p191 = scmp.eq.s32.totalorder %s20, 0
      %p192 = por %p190, %p191
      %p193 = scmp.ne.s32.totalorder %s182, %s185
      %p194 = scmp.eq.s32.totalorder %s25, 1
      %p195 = por %p193, %p194
      %p196 = scmp.ne.s32.totalorder %s185, %s186
      %p197 = scmp.eq.s32.totalorder %s25, 0
      %p198 = por %p196, %p197
      %p199 = scmp.ne.s32.totalorder %s185, %s186
      %p200 = scmp.eq.s32.totalorder %s26, 1
      %p201 = por %p199, %p200
      %p203 = scmp.ne.s32.totalorder %s186, %s202
      %p204 = scmp.eq.s32.totalorder %s26, 0
      %p205 = por %p203, %p204
      %p206 = scmp.le.s32.totalorder 1, %s20
      %p207 = scmp.lt.s32.totalorder %s20, 3
      %p208 = pnand %p206, %p207
      %p209 = pneg %p208
      // Predicated region
      $region9: #{tpu_custom_call.1} parent=5 // pred_check
        _
      $region10: #{tpu_custom_call.1} parent=5 // pred_check_branch
        %211 = sbr.rel (%p208) target = $region12
      $region11: #{tpu_custom_call.1} parent=5 // pred_region
        %s212 = ssub.s32 %s20, 1
        // Predicated region
        $region13: #{tpu_custom_call.1} parent=11 // pred_check
          %p213 = pneg %p67
        $region14: #{tpu_custom_call.1} parent=11 // pred_check_branch
          %215 = sbr.rel (%p213) target = $region16
        $region15: #{tpu_custom_call.1} parent=11 // pred_region
          %217 = vsyncadd [#allocation6], 0
          %s218 = sshll.u32 %s1, 4
          %s219 = int_to_ptr.hbm [resolvable:$true] %s218
          %s220 = sshll.u32 [#allocation5], 4
          %s221 = int_to_ptr.vmem [resolvable:$true] %s220
          %226 = dma.hbm_to_vmem [thread:$0]  %s219, 4096, %s221, [#allocation6], 128, 128, 8
        $region16: #{tpu_custom_call.1} parent=11 // pred_fallthru
          _
        // Predicated region
        $region17: #{tpu_custom_call.1} parent=11 // pred_check
          %p227 = pneg %p88
        $region18: #{tpu_custom_call.1} parent=11 // pred_check_branch
          %229 = sbr.rel (%p227) target = $region20
        $region19: #{tpu_custom_call.1} parent=11 // pred_region
          _
        $region20: #{tpu_custom_call.1} parent=11 // pred_fallthru
          _
        // Predicated region
        $region21: #{tpu_custom_call.1} parent=11 // pred_check
          %p230 = pneg %p109
        $region22: #{tpu_custom_call.1} parent=11 // pred_check_branch
          %232 = sbr.rel (%p230) target = $region24
        $region23: #{tpu_custom_call.1} parent=11 // pred_region
          %234 = vsyncadd [#allocation6], 0
          %s235 = sshll.u32 %s3, 4
          %s236 = int_to_ptr.hbm [resolvable:$true] %s235
          %s237 = sshll.u32 [#allocation7], 4
          %s238 = int_to_ptr.vmem [resolvable:$true] %s237
          %243 = dma.hbm_to_vmem [thread:$0]  %s236, 2048, %s238, [#allocation6], 128, 128, 8
        $region24: #{tpu_custom_call.1} parent=11 // pred_fallthru
          _
        // Predicated region
        $region25: #{tpu_custom_call.1} parent=11 // pred_check
          %p244 = pneg %p130
        $region26: #{tpu_custom_call.1} parent=11 // pred_check_branch
          %246 = sbr.rel (%p244) target = $region28
        $region27: #{tpu_custom_call.1} parent=11 // pred_region
          _
        $region28: #{tpu_custom_call.1} parent=11 // pred_fallthru
          _
        // Predicated region
        $region29: #{tpu_custom_call.1} parent=11 // pred_check
          %p247 = pneg %p151
        $region30: #{tpu_custom_call.1} parent=11 // pred_check_branch
          %249 = sbr.rel (%p247) target = $region32
        $region31: #{tpu_custom_call.1} parent=11 // pred_region
          _
        $region32: #{tpu_custom_call.1} parent=11 // pred_fallthru
          _
        // Predicated region
        $region33: #{tpu_custom_call.1} parent=11 // pred_check
          %p250 = pneg %p172
        $region34: #{tpu_custom_call.1} parent=11 // pred_check_branch
          %252 = sbr.rel (%p250) target = $region36
        $region35: #{tpu_custom_call.1} parent=11 // pred_region
          _
        $region36: #{tpu_custom_call.1} parent=11 // pred_fallthru
          _
      $region12: #{tpu_custom_call.1} parent=5 // pred_fallthru
        _
      %p253 = scmp.lt.s32.totalorder %s20, 2
      // Predicated region
      $region37: #{tpu_custom_call.1} parent=5 // pred_check
        %p254 = pneg %p253
      $region38: #{tpu_custom_call.1} parent=5 // pred_check_branch
        %256 = sbr.rel (%p254) target = $region40
      $region39: #{tpu_custom_call.1} parent=5 // pred_region
        // Predicated region
        $region41: #{tpu_custom_call.1} parent=39 // pred_check
          %p257 = pneg %p40
        $region42: #{tpu_custom_call.1} parent=39 // pred_check_branch
          %259 = sbr.rel (%p257) target = $region44
        $region43: #{tpu_custom_call.1} parent=39 // pred_region
          %s260 = sand.u32 %s30, 1
          %s261 = scalar_lea.sflag [#allocation3], %s260
          %s262 = sand.u32 %s30, 1
          %s263 = smul.addr %s262, 16
          %s264 = scalar_lea.vmem [#allocation2], %s263
          %266 = vsyncadd %s261, 0
          %s267 = smul.addr %s20, 2
          %s268 = smul.addr %s267, 8
          %s269 = scalar_lea.hbm %s0, %s268
          %s271 = sshll.u32 %s269, 4
          %s272 = int_to_ptr.hbm [resolvable:$true] %s271
          %s273 = sshll.u32 %s264, 4
          %s274 = int_to_ptr.vmem [resolvable:$true] %s273
          %276 = dma.hbm_to_vmem [thread:$0]  %s272, 256, %s274, %s261
        $region44: #{tpu_custom_call.1} parent=39 // pred_fallthru
          _
      $region40: #{tpu_custom_call.1} parent=5 // pred_fallthru
        _
      %p277 = scmp.le.s32.totalorder 1, %s20
      %p278 = scmp.lt.s32.totalorder %s20, 3
      %p279 = pnand %p277, %p278
      %p280 = pneg %p279
      // Predicated region
      $region45: #{tpu_custom_call.1} parent=5 // pred_check
        _
      $region46: #{tpu_custom_call.1} parent=5 // pred_check_branch
        %282 = sbr.rel (%p279) target = $region48
      $region47: #{tpu_custom_call.1} parent=5 // pred_region
        %s283 = ssub.s32 %s20, 1
        %s284 = sand.u32 %s33, 1
        %s285 = scalar_lea.sflag [#allocation3], %s284
        %s286 = sand.u32 %s33, 1
        %s287 = smul.addr %s286, 16
        %s288 = scalar_lea.vmem [#allocation2], %s287
        // Predicated region
        $region49: #{tpu_custom_call.1} parent=47 // pred_check
          %p289 = pneg %p46
        $region50: #{tpu_custom_call.1} parent=47 // pred_check_branch
          %291 = sbr.rel (%p289) target = $region52
        $region51: #{tpu_custom_call.1} parent=47 // pred_region
          %293 = dma.done %s285, 256
        $region52: #{tpu_custom_call.1} parent=47 // pred_fallthru
          _
        // Predicated region
        $region53: #{tpu_custom_call.1} parent=47 // pred_check
          %p294 = pneg %p67
        $region54: #{tpu_custom_call.1} parent=47 // pred_check_branch
          %296 = sbr.rel (%p294) target = $region56
        $region55: #{tpu_custom_call.1} parent=47 // pred_region
          %298 = dma.done [#allocation6], 4096
        $region56: #{tpu_custom_call.1} parent=47 // pred_fallthru
          _
        // Predicated region
        $region57: #{tpu_custom_call.1} parent=47 // pred_check
          %p299 = pneg %p109
        $region58: #{tpu_custom_call.1} parent=47 // pred_check_branch
          %301 = sbr.rel (%p299) target = $region60
        $region59: #{tpu_custom_call.1} parent=47 // pred_region
          %303 = dma.done [#allocation6], 2048
        $region60: #{tpu_custom_call.1} parent=47 // pred_fallthru
          _
        %s304 = sand.u32 %s33, 1
        %s305 = scalar_lea.sflag [#allocation3], %s304
        %s306 = sand.u32 %s33, 1
        %s307 = smul.addr %s306, 16
        %s308 = scalar_lea.vmem [#allocation2], %s307
        %p309 = pneg %p46
        %p310 = pneg %p43
        %p311 = pneg %p67
        %p312 = pneg %p64
        %p313 = pneg %p88
        %p314 = pneg %p85
        %p315 = pneg %p109
        %p316 = pneg %p106
        %p317 = pneg %p130
        %p318 = pneg %p127
        %p319 = pneg %p151
        %p320 = pneg %p148
        %p321 = pneg %p172
        %p322 = pneg %p169
        %p323 = pneg %p198
        %p324 = pneg %p195
        %s325 = sand.u32 %s185, 1
        %s326 = scalar_lea.sflag [#allocation4], %s325
        %s327 = sand.u32 %s185, 1
        %s328 = smul.addr %s327, 8
        %s329 = scalar_lea.vmem [#allocation8], %s328
        %v330 = vld [vmem:[%s288] sm:$0xff]
        %v331 = vld [vmem:[%s288 + $0x8] sm:$0xff]
        %v332 = vld [vmem:[#allocation5] sm:$0xff]
        %v333 = vld [vmem:[#allocation5 + $0x8] sm:$0xff]
        %v334 = vld [vmem:[#allocation5 + $0x10] sm:$0xff]
        %v335 = vld [vmem:[#allocation5 + $0x18] sm:$0xff]
        %v336 = vld [vmem:[#allocation5 + $0x20] sm:$0xff]
        %v337 = vld [vmem:[#allocation5 + $0x28] sm:$0xff]
        %v338 = vld [vmem:[#allocation5 + $0x30] sm:$0xff]
        %v339 = vld [vmem:[#allocation5 + $0x38] sm:$0xff]
        %v340 = vld [vmem:[#allocation5 + $0x40] sm:$0xff]
        %v341 = vld [vmem:[#allocation5 + $0x48] sm:$0xff]
        %v342 = vld [vmem:[#allocation5 + $0x50] sm:$0xff]
        %v343 = vld [vmem:[#allocation5 + $0x58] sm:$0xff]
        %v344 = vld [vmem:[#allocation5 + $0x60] sm:$0xff]
        %v345 = vld [vmem:[#allocation5 + $0x68] sm:$0xff]
        %v346 = vld [vmem:[#allocation5 + $0x70] sm:$0xff]
        %v347 = vld [vmem:[#allocation5 + $0x78] sm:$0xff]
        %v348 = vld [vmem:[#allocation5 + $0x80] sm:$0xff]
        %v349 = vld [vmem:[#allocation5 + $0x88] sm:$0xff]
        %v350 = vld [vmem:[#allocation5 + $0x90] sm:$0xff]
        %v351 = vld [vmem:[#allocation5 + $0x98] sm:$0xff]
        %v352 = vld [vmem:[#allocation5 + $0xa0] sm:$0xff]
        %v353 = vld [vmem:[#allocation5 + $0xa8] sm:$0xff]
        %v354 = vld [vmem:[#allocation5 + $0xb0] sm:$0xff]
        %v355 = vld [vmem:[#allocation5 + $0xb8] sm:$0xff]
        %v356 = vld [vmem:[#allocation5 + $0xc0] sm:$0xff]
        %v357 = vld [vmem:[#allocation5 + $0xc8] sm:$0xff]
        %v358 = vld [vmem:[#allocation5 + $0xd0] sm:$0xff]
        %v359 = vld [vmem:[#allocation5 + $0xd8] sm:$0xff]
        %v360 = vld [vmem:[#allocation5 + $0xe0] sm:$0xff]
        %v361 = vld [vmem:[#allocation5 + $0xe8] sm:$0xff]
        %v362 = vld [vmem:[#allocation5 + $0xf0] sm:$0xff]
        %v363 = vld [vmem:[#allocation5 + $0xf8] sm:$0xff]
        %v364 = vld [vmem:[%s2] sm:$0x1]
        %v366 = vperm.slane %v364, 0
        %368 = vmatpush.msra.mxu0 %v347
        %369 = vmatpush.msra.mxu0 %v346
        %370 = vmatpush.msra.mxu0 %v345
        %371 = vmatpush.msra.mxu0 %v344
        %372 = vmatpush.msra.mxu0 %v343
        %373 = vmatpush.msra.mxu0 %v342
        %374 = vmatpush.msra.mxu0 %v341
        %375 = vmatpush.msra.mxu0 %v340
        %376 = vmatpush.msra.mxu0 %v339
        %377 = vmatpush.msra.mxu0 %v338
        %378 = vmatpush.msra.mxu0 %v337
        %379 = vmatpush.msra.mxu0 %v336
        %380 = vmatpush.msra.mxu0 %v335
        %381 = vmatpush.msra.mxu0 %v334
        %382 = vmatpush.msra.mxu0 %v333
        %383 = vmatpush.msra.mxu0 %v332
        %384 = vmatmul.f32.gmra.mxu0 %v330
        %v385 = vpop.f32.mrf.mxu0
        %v386 = vadd.f32 %v366, %v385
        %387 = vdwg.mxu0
        %388 = vmatpush.msra.mxu0 %v363
        %389 = vmatpush.msra.mxu0 %v362
        %390 = vmatpush.msra.mxu0 %v361
        %391 = vmatpush.msra.mxu0 %v360
        %392 = vmatpush.msra.mxu0 %v359
        %393 = vmatpush.msra.mxu0 %v358
        %394 = vmatpush.msra.mxu0 %v357
        %395 = vmatpush.msra.mxu0 %v356
        %396 = vmatpush.msra.mxu0 %v355
        %397 = vmatpush.msra.mxu0 %v354
        %398 = vmatpush.msra.mxu0 %v353
        %399 = vmatpush.msra.mxu0 %v352
        %400 = vmatpush.msra.mxu0 %v351
        %401 = vmatpush.msra.mxu0 %v350
        %402 = vmatpush.msra.mxu0 %v349
        %403 = vmatpush.msra.mxu0 %v348
        %404 = vmatmul.f32.gmra.mxu0 %v331
        %v405 = vpop.f32.mrf.mxu0
        %v406 = vadd.f32 %v386, %v405
        %407 = vdwg.mxu0
        %v408 = vmul.f32 %v406, 0.5
        %v409 = vmul.f32 %v406, 0.70710677
        %v410 = vmul.f32 %v409, %v409
        %v411 = vmin.f32 16.0, %v410
        %v412 = vmul.f32 %v411, 2.1237322e-06
        %v413 = vadd.f32 %v412, 0.00028619796
        %v414 = vmul.f32 %v411, %v413
        %v415 = vadd.f32 %v414, 0.0036580483
        %v416 = vmul.f32 %v411, %v415
        %v417 = vadd.f32 %v416, 0.05243302
        %v418 = vmul.f32 %v411, %v417
        %v419 = vadd.f32 %v418, 0.18741608
        %v420 = vmul.f32 %v411, %v419
        %v421 = vadd.f32 %v420, 1.1283791
        %v422 = vmul.f32 %v409, %v421
        %v423 = vmul.f32 %v411, 3.8918573e-05
        %v424 = vadd.f32 %v423, 0.001143296
        %v425 = vmul.f32 %v411, %v424
        %v426 = vadd.f32 %v425, 0.014752088
        %v427 = vmul.f32 %v411, %v426
        %v428 = vadd.f32 %v427, 0.112945676
        %v429 = vmul.f32 %v411, %v428
        %v430 = vadd.f32 %v429, 0.4994258
        %v431 = vmul.f32 %v411, %v430
        %v432 = vadd.f32 %v431, 1.0
        %v433 = vrcp.pop %v432
        %v434 = vmul.f32 %v432, %v433
        %v435 = vsub.f32 1.0, %v434
        %v436 = vmul.f32 %v433, %v435
        %v437 = vadd.f32 %v433, %v436
        %vm438 = vweird.f32 %v432
        %vm439 = vweird.f32 %v433
        %vm440 = vmor %vm438, %vm439
        %v441 = vsel %vm440, %v433, %v437
        %v442 = vand.u32 2147483647, %v432
        %vm443 = vcmp.eq.f32.partialorder %v442, 8.507059e+37
        %v444 = vand.u32 %v432, 2147483648
        %v445 = vor.u32 1.1754944e-38, %v444
        %v446 = vsel %vm443, %v445, %v441
        %v447 = vmul.f32 %v422, %v446
        %v448 = vmin.f32 %v447, 1.0
        %v449 = vmax.f32 %v448, -1.0
        %v450 = vadd.f32 %v449, 1.0
        %v451 = vmul.f32 %v408, %v450
        %v452 = vld [vmem:[#allocation7] sm:$0xff]
        %v453 = vld [vmem:[#allocation7 + $0x8] sm:$0xff]
        %v454 = vld [vmem:[#allocation7 + $0x10] sm:$0xff]
        %v455 = vld [vmem:[#allocation7 + $0x18] sm:$0xff]
        %v456 = vld [vmem:[#allocation7 + $0x20] sm:$0xff]
        %v457 = vld [vmem:[#allocation7 + $0x28] sm:$0xff]
        %v458 = vld [vmem:[#allocation7 + $0x30] sm:$0xff]
        %v459 = vld [vmem:[#allocation7 + $0x38] sm:$0xff]
        %v460 = vld [vmem:[#allocation7 + $0x40] sm:$0xff]
        %v461 = vld [vmem:[#allocation7 + $0x48] sm:$0xff]
        %v462 = vld [vmem:[#allocation7 + $0x50] sm:$0xff]
        %v463 = vld [vmem:[#allocation7 + $0x58] sm:$0xff]
        %v464 = vld [vmem:[#allocation7 + $0x60] sm:$0xff]
        %v465 = vld [vmem:[#allocation7 + $0x68] sm:$0xff]
        %v466 = vld [vmem:[#allocation7 + $0x70] sm:$0xff]
        %v467 = vld [vmem:[#allocation7 + $0x78] sm:$0xff]
        %v468 = vld [vmem:[%s4] sm:$0x1]
        %v470 = vperm.slane %v468, 0
        %472 = vmatpush.msra.mxu0 %v467
        %473 = vmatpush.msra.mxu0 %v466
        %474 = vmatpush.msra.mxu0 %v465
        %475 = vmatpush.msra.mxu0 %v464
        %476 = vmatpush.msra.mxu0 %v463
        %477 = vmatpush.msra.mxu0 %v462
        %478 = vmatpush.msra.mxu0 %v461
        %479 = vmatpush.msra.mxu0 %v460
        %480 = vmatpush.msra.mxu0 %v459
        %481 = vmatpush.msra.mxu0 %v458
        %482 = vmatpush.msra.mxu0 %v457
        %483 = vmatpush.msra.mxu0 %v456
        %484 = vmatpush.msra.mxu0 %v455
        %485 = vmatpush.msra.mxu0 %v454
        %486 = vmatpush.msra.mxu0 %v453
        %487 = vmatpush.msra.mxu0 %v452
        %488 = vmatmul.f32.gmra.mxu0 %v451
        %v489 = vpop.f32.mrf.mxu0
        %v490 = vadd.f32 %v470, %v489
        %491 = vdwg.mxu0
        %v492 = vadd.f32 %v490, %v406
        %493 = vadd.xlane.f32.xlu0 %v492
        %v494 = vpop.xlane.xlu0 %493
        %v495 = vrcp.pop 128.0
        %v496 = vmul.f32 128.0, %v495
        %v497 = vsub.f32 1.0, %v496
        %v498 = vmul.f32 %v495, %v497
        %v499 = vadd.f32 %v495, %v498
        %vm500 = vweird.f32 %v495
        %v501 = vsel %vm500, %v495, %v499
        %v502 = vmul.f32 %v494, %v501
        %v503 = vsub.f32 %v492, %v502
        %v504 = vmul.f32 %v503, %v503
        %505 = vadd.xlane.f32.xlu0 %v504
        %v506 = vpop.xlane.xlu0 %505
        %v507 = vmul.f32 %v506, %v501
        %v508 = vadd.f32 %v507, 1e-05
        %v509 = vrsqrt.pop %v508
        %v510 = vmul.f32 %v509, %v508
        %v511 = vmul.f32 %v510, %v509
        %v512 = vmul.f32 0.5, %v511
        %v513 = vsub.f32 1.5, %v512
        %v514 = vmul.f32 %v509, %v513
        %vm515 = vweird.f32 %v508
        %vm516 = vweird.f32 %v509
        %vm517 = vmor %vm515, %vm516
        %v518 = vsel %vm517, %v509, %v514
        %v519 = vmul.f32 %v503, %v518
        %v520 = vld [vmem:[%s5] sm:$0x1]
        %v522 = vperm.slane %v520, 0
        %v524 = vmul.f32 %v519, %v522
        %v525 = vld [vmem:[%s6] sm:$0x1]
        %v527 = vperm.slane %v525, 0
        %v529 = vadd.f32 %v524, %v527
        %530 = vst [vmem:[%s329] sm:$0xff] %v529
        %s531 = sand.u32 %s185, 1
        %s532 = scalar_lea.sflag [#allocation4], %s531
        %s533 = sand.u32 %s185, 1
        %s534 = smul.addr %s533, 8
        %s535 = scalar_lea.vmem [#allocation8], %s534
        // Predicated region
        $region61: #{tpu_custom_call.1} parent=47 // pred_check
          %p536 = pneg %p195
        $region62: #{tpu_custom_call.1} parent=47 // pred_check_branch
          %538 = sbr.rel (%p536) target = $region64
        $region63: #{tpu_custom_call.1} parent=47 // pred_region
          %540 = vsyncadd %s532, 0
          %s541 = smul.addr %s25, 8
          %s542 = scalar_lea.hbm %s7, %s541
          %s544 = sshll.u32 %s535, 4
          %s545 = int_to_ptr.vmem [resolvable:$true] %s544
          %s546 = sshll.u32 %s542, 4
          %s547 = int_to_ptr.hbm [resolvable:$true] %s546
          %549 = dma.vmem_to_hbm [thread:$0]  %s545, 128, %s547, %s532
        $region64: #{tpu_custom_call.1} parent=47 // pred_fallthru
          _
      $region48: #{tpu_custom_call.1} parent=5 // pred_fallthru
        _
      %p550 = scmp.le.s32.totalorder 2, %s20
      // Predicated region
      $region65: #{tpu_custom_call.1} parent=5 // pred_check
        %p551 = pneg %p550
      $region66: #{tpu_custom_call.1} parent=5 // pred_check_branch
        %553 = sbr.rel (%p551) target = $region68
      $region67: #{tpu_custom_call.1} parent=5 // pred_region
        %s554 = ssub.s32 %s20, 2
        // Predicated region
        $region69: #{tpu_custom_call.1} parent=67 // pred_check
          %p555 = pneg %p201
        $region70: #{tpu_custom_call.1} parent=67 // pred_check_branch
          %557 = sbr.rel (%p555) target = $region72
        $region71: #{tpu_custom_call.1} parent=67 // pred_region
          %s558 = sand.u32 %s186, 1
          %s559 = scalar_lea.sflag [#allocation4], %s558
          %s560 = sand.u32 %s186, 1
          %s561 = smul.addr %s560, 8
          %s562 = scalar_lea.vmem [#allocation8], %s561
          %564 = dma.done %s559, 128
        $region72: #{tpu_custom_call.1} parent=67 // pred_fallthru
          _
      $region68: #{tpu_custom_call.1} parent=5 // pred_fallthru
        _
    $region6: #{tpu_custom_call.1} parent=1 // loop_footer
      %s24 = sadd.s32 1, %s20
    $region7: #{tpu_custom_call.1} parent=1 // loop_footer_branch
      %19 = sbr.rel target = $region3
    $region8: #{tpu_custom_call.1} parent=1 // loop_exit
      _
    %565 = vsyncpa [#allocation3], 1
    %s566 = scalar_lea.sflag [#allocation3], 1
    %567 = vsyncpa %s566, 1
    %568 = vsyncpa [#allocation6], 1
    %569 = vsyncpa [#allocation4], 1
    %s570 = scalar_lea.sflag [#allocation4], 1
    %571 = vsyncpa %s570, 1

</llo_original>
